<compile_context>
chip_gen: v7x
topology: tpu7x:2x2x1
jax: 0.10.0
libtpu: 0.0.40
codegen_flags: <defaults>
</compile_context>

<pallas_src>
import functools
import math

import jax
import jax.numpy as jnp
from jax.experimental import pallas as pl
from jax.experimental.pallas import tpu as pltpu

_LANE = 128
_EPS = 1e-5


def _round_up(x, m):
    return ((x + m - 1) // m) * m


def _pad2(a, rows, cols):
    return jnp.pad(a, ((0, rows - a.shape[0]), (0, cols - a.shape[1])))


# --------------------------- shared epilogue (BN -> ReLU -> Linear2 -> +shortcut -> LN) ----
def _bn_relu_fc2_ln(h, s, scale, shift, w2_ref, bias, ln_g, ln_b, dp_real, out_dtype):
    # Folded BatchNorm (scale/shift precomputed from batch statistics) + ReLU.
    h = jnp.maximum(h * scale + shift, 0.0)
    # Linear2 on the MXU, then shortcut and the combined (b2 + bs) bias.
    h = jnp.dot(h.astype(w2_ref.dtype), w2_ref[...], preferred_element_type=jnp.float32)
    h = h + s + bias
    # LayerNorm over the real proj_dim (padded lanes of h are exact zeros); one-pass var.
    inv_d = 1.0 / dp_real
    mu = jnp.sum(h, axis=-1, keepdims=True) * inv_d
    var = jnp.sum(h * h, axis=-1, keepdims=True) * inv_d - mu * mu
    inv = jax.lax.rsqrt(var + _EPS)
    return ((h - mu) * inv * ln_g + ln_b).astype(out_dtype)


# --------------------- pass 1 (recompute path): BN batch statistics only -------------------
def _stats_kernel(x_ref, w1_ref, sum_ref, sq_ref):
    i = pl.program_id(1)            # inner ("arbitrary") axis; axis 0 is the core split

    @pl.when(i == 0)
    def _():
        sum_ref[...] = jnp.zeros_like(sum_ref)
        sq_ref[...] = jnp.zeros_like(sq_ref)

    h = jnp.dot(x_ref[...], w1_ref[...], preferred_element_type=jnp.float32)
    # Padded rows of x are zero and there is no pre-BN bias, so they contribute exactly zero.
    # The (1, dp) partial broadcasts over the 8-sublane accumulator block (full-block store).
    sum_ref[...] += jnp.sum(h, axis=0, keepdims=True)
    sq_ref[...] += jnp.sum(h * h, axis=0, keepdims=True)


# ------------- pass 1 (materialize path): fused [W1|Ws] projection + BN statistics ---------
def _proj_stats_kernel(x_ref, wcat_ref, y_ref, sum_ref, sq_ref, *, dp_pad):
    i = pl.program_id(1)

    @pl.when(i == 0)
    def _():
        sum_ref[...] = jnp.zeros_like(sum_ref)
        sq_ref[...] = jnp.zeros_like(sq_ref)

    # One wide MXU matmul covers both Linear1 and the shortcut Linear (x pushed once).
    y = jnp.dot(x_ref[...], wcat_ref[...], preferred_element_type=jnp.float32)
    y_ref[...] = y.astype(y_ref.dtype)       # store y in compute dtype (bf16) -> half traffic

    h = y[:, :dp_pad]                          # stats from the f32 result, before the cast
    sum_ref[...] += jnp.sum(h, axis=0, keepdims=True)
    sq_ref[...] += jnp.sum(h * h, axis=0, keepdims=True)


# ---------------- pass 2 (recompute path): recompute projection + full epilogue ------------
def _fused_tail_kernel(x_ref, wcat_ref, scale_ref, shift_ref, w2_ref, bias_ref,
                       ln_g_ref, ln_b_ref, o_ref, *, dp_pad, dp_real):
    y = jnp.dot(x_ref[...], wcat_ref[...], preferred_element_type=jnp.float32)
    o_ref[...] = _bn_relu_fc2_ln(y[:, :dp_pad], y[:, dp_pad:],
                                 scale_ref[...], shift_ref[...], w2_ref,
                                 bias_ref[...], ln_g_ref[...], ln_b_ref[...],
                                 dp_real, o_ref.dtype)


# ---------------- pass 2 (materialize path): read y + full epilogue ------------------------
def _normalize_kernel(y_ref, scale_ref, shift_ref, w2_ref, bias_ref,
                      ln_g_ref, ln_b_ref, o_ref, *, dp_pad, dp_real):
    y = y_ref[...].astype(jnp.float32)
    o_ref[...] = _bn_relu_fc2_ln(y[:, :dp_pad], y[:, dp_pad:],
                                 scale_ref[...], shift_ref[...], w2_ref,
                                 bias_ref[...], ln_g_ref[...], ln_b_ref[...],
                                 dp_real, o_ref.dtype)


# ------------------------------------ host-side helpers ------------------------------------
def prepare_params(params, *, compute_dtype=jnp.bfloat16):
    """One-time prep: pad to lane multiples, concat [W1|Ws], cast, fold b2+bs.

    Hoisted out of the per-call wrapper so none of this re-runs on the HBM-bound path.
    """
    d_in, d_proj = params["w1_t"].shape
    d_in_p = _round_up(d_in, _LANE)
    d_proj_p = _round_up(d_proj, _LANE)

    w1 = _pad2(params["w1_t"], d_in_p, d_proj_p)
    ws = _pad2(params["ws_t"], d_in_p, d_proj_p)
    return {
        "_prepared": True,
        "d_in": d_in,
        "d_proj": d_proj,
        "compute_dtype": jnp.dtype(compute_dtype),
        "w1": w1.astype(compute_dtype),                                   # (d_in_p, d_proj_p)
        "w_cat": jnp.concatenate([w1, ws], axis=1).astype(compute_dtype),  # (d_in_p, 2*d_proj_p)
        "w2": _pad2(params["w2_t"], d_proj_p, d_proj_p).astype(compute_dtype),
        # b1 is dropped (cancelled by the BN mean subtraction); b2 + bs fold into one bias.
        "bias": _pad2(params["b2"] + params["bs"], 1, d_proj_p).astype(jnp.float32),
        "bn_g": _pad2(params["bn_gamma"], 1, d_proj_p).astype(jnp.float32),
        "bn_b": _pad2(params["bn_beta"], 1, d_proj_p).astype(jnp.float32),
        "ln_g": _pad2(params["ln_gamma"], 1, d_proj_p).astype(jnp.float32),
        "ln_b": _pad2(params["ln_beta"], 1, d_proj_p).astype(jnp.float32),
    }


def _pick_tile(requested, N, d_in_p, d_cat, d_proj_p, cbytes, out_bytes, materialize):
    """Largest batch tile (multiple of 8) whose VMEM need fits a per-generation-safe budget.

    The budget accounts for the default 2x buffering of every BlockSpec input/output,
    including the constant-index (resident) weights, so it is a guarantee rather than a hope.
    """
    budget = 28 << 20        # < 32 MiB scoped default (v6e/v7x) and < 64 MiB physical (v7x)
    nt = _round_up(min(max(int(requested), 8), _round_up(N, 8)), 8)
    while True:
        w1_bytes = d_in_p * (d_cat if materialize else d_proj_p) * cbytes
        p1 = 2 * nt * d_in_p * cbytes + 2 * w1_bytes + 2 * 2 * 8 * d_proj_p * 4
        if materialize:
            p1 += 2 * nt * d_cat * cbytes                      # y output tile (compute dtype)
        in_cols = d_cat if materialize else d_in_p
        w2_bytes = d_proj_p * d_proj_p * cbytes
        wcat_bytes = 0 if materialize else d_in_p * d_cat * cbytes
        p2 = (2 * nt * in_cols * cbytes + 2 * (w2_bytes + wcat_bytes)
              + 2 * nt * d_proj_p * out_bytes + 2 * 5 * d_proj_p * 4)
        need = max(p1, p2)
        if need <= budget or nt <= 8:
            return nt, need
        nt = max(8, _round_up(nt // 2, 8))


def mi_projection(x, params, *, compute_dtype=jnp.bfloat16, n_tile=512,
                  out_dtype=jnp.float32, materialize_y=None):
    """x: (N, inp_dim) f32. params: init_params() output or prepare_params() output.

    Returns (N, proj_dim) in out_dtype (f32 default; pass bf16 to halve the writeback).
    """
    if not params.get("_prepared", False):
        params = prepare_params(params, compute_dtype=compute_dtype)
    cdt = params["compute_dtype"]
    cbytes = jnp.dtype(cdt).itemsize
    out_bytes = jnp.dtype(out_dtype).itemsize

    N, d_in = x.shape
    assert d_in == params["d_in"]
    d_proj = params["d_proj"]
    d_in_p, d_cat = params["w_cat"].shape
    d_proj_p = d_cat // 2

    # Recompute the projection in pass 2 unless re-reading x costs more HBM traffic than a
    # compute-dtype y round trip would (x read twice: d_in_p/row vs y write+read: 2*d_cat/row).
    materialize = (d_in_p > 4 * d_proj_p) if materialize_y is None else bool(materialize_y)

    n_tile, need = _pick_tile(n_tile, N, d_in_p, d_cat, d_proj_p, cbytes, out_bytes,
                              materialize)
    n_pad = _round_up(N, 2 * n_tile)          # pass-1 grid is (2 core-blocks, n_half)
    n_half = n_pad // (2 * n_tile)
    n_tiles = n_pad // n_tile
    vmem_limit = int(min(max(2 * need, 32 << 20), 64 << 20))

    # Lane-dense padding directly in the compute dtype; padded rows/cols stay exactly zero
    # through the whole pipeline and are sliced off at the end.
    x_p = jnp.pad(x.astype(cdt), ((0, n_pad - N), (0, d_in_p - d_in)))

    # ------------------- pass 1: BN batch statistics (+ y if materialized) -----------------
    # Per-core partial accumulators: (2 cores) x (8 sublanes, d_proj_p); every sublane of a
    # core block holds the same partial, the wrapper adds rows 0 and 8.
    acc_shape = jax.ShapeDtypeStruct((16, d_proj_p), jnp.float32)
    acc_spec = pl.BlockSpec((8, d_proj_p), lambda c, i: (c, 0))
    x_spec = pl.BlockSpec((n_tile, d_in_p), lambda c, i: (c * n_half + i, 0))
    p1_params = pltpu.CompilerParams(dimension_semantics=("parallel", "arbitrary"),
                                     vmem_limit_bytes=vmem_limit)

    if materialize:
        k1 = functools.partial(_proj_stats_kernel, dp_pad=d_proj_p)
        y, s_blk, q_blk = pl.pallas_call(
            k1,
            grid=(2, n_half),
            out_shape=(jax.ShapeDtypeStruct((n_pad, d_cat), cdt), acc_shape, acc_shape),
            in_specs=[
                x_spec,
                pl.BlockSpec((d_in_p, d_cat), lambda c, i: (0, 0)),      # VMEM-resident
            ],
            out_specs=[
                pl.BlockSpec((n_tile, d_cat), lambda c, i: (c * n_half + i, 0)),
                acc_spec, acc_spec,
            ],
            compiler_params=p1_params,
            cost_estimate=pl.CostEstimate(
                flops=int(2 * n_pad * d_in_p * d_cat + 3 * n_pad * d_proj_p),
                transcendentals=0,
                bytes_accessed=int(n_pad * d_in_p * cbytes + d_in_p * d_cat * cbytes
                                   + n_pad * d_cat * cbytes + 2 * 16 * d_proj_p * 4)),
        )(x_p, params["w_cat"])
    else:
        y = None
        s_blk, q_blk = pl.pallas_call(
            _stats_kernel,
            grid=(2, n_half),
            out_shape=(acc_shape, acc_shape),
            in_specs=[
                x_spec,
                pl.BlockSpec((d_in_p, d_proj_p), lambda c, i: (0, 0)),   # W1 only, resident
            ],
            out_specs=[acc_spec, acc_spec],
            compiler_params=p1_params,
            cost_estimate=pl.CostEstimate(
                flops=int(2 * n_pad * d_in_p * d_proj_p + 3 * n_pad * d_proj_p),
                transcendentals=0,
                bytes_accessed=int(n_pad * d_in_p * cbytes + d_in_p * d_proj_p * cbytes
                                   + 2 * 16 * d_proj_p * 4)),
        )(x_p, params["w1"])

    # Fold BatchNorm into one per-column scale/shift (tiny (1, d_proj_p) math, real N only).
    h_sum = s_blk[0::8].sum(axis=0, keepdims=True)
    h_sq = q_blk[0::8].sum(axis=0, keepdims=True)
    inv_n = 1.0 / N
    mean = h_sum * inv_n
    var = jnp.maximum(h_sq * inv_n - mean * mean, 0.0)
    bn_scale = params["bn_g"] * jax.lax.rsqrt(var + _EPS)
    bn_shift = params["bn_b"] - mean * bn_scale

    # ------------- pass 2: folded BN + ReLU + Linear2 + shortcut + LayerNorm ---------------
    vec_spec = pl.BlockSpec((1, d_proj_p), lambda i: (0, 0))
    common_specs = [vec_spec, vec_spec,                                   # scale, shift
                    pl.BlockSpec((d_proj_p, d_proj_p), lambda i: (0, 0)),  # w2, resident
                    vec_spec, vec_spec, vec_spec]                          # bias, ln_g, ln_b
    common_args = (bn_scale, bn_shift, params["w2"], params["bias"],
                   params["ln_g"], params["ln_b"])

    if materialize:
        k2 = functools.partial(_normalize_kernel, dp_pad=d_proj_p, dp_real=d_proj)
        in_specs = [pl.BlockSpec((n_tile, d_cat), lambda i: (i, 0))] + common_specs
        args = (y,) + common_args
        flops2 = 2 * n_pad * d_proj_p * d_proj_p + 12 * n_pad * d_proj_p
        bytes2 = (n_pad * d_cat * cbytes + d_proj_p * d_proj_p * cbytes
                  + 5 * d_proj_p * 4 + n_pad * d_proj_p * out_bytes)
    else:
        k2 = functools.partial(_fused_tail_kernel, dp_pad=d_proj_p, dp_real=d_proj)
        in_specs = [pl.BlockSpec((n_tile, d_in_p), lambda i: (i, 0)),
                    pl.BlockSpec((d_in_p, d_cat), lambda i: (0, 0))] + common_specs
        args = (x_p, params["w_cat"]) + common_args
        flops2 = (2 * n_pad * d_in_p * d_cat + 2 * n_pad * d_proj_p * d_proj_p
                  + 12 * n_pad * d_proj_p)
        bytes2 = (n_pad * d_in_p * cbytes + (d_in_p * d_cat + d_proj_p * d_proj_p) * cbytes
                  + 5 * d_proj_p * 4 + n_pad * d_proj_p * out_bytes)

    out = pl.pallas_call(
        k2,
        grid=(n_tiles,),
        out_shape=jax.ShapeDtypeStruct((n_pad, d_proj_p), out_dtype),
        in_specs=in_specs,
        out_specs=pl.BlockSpec((n_tile, d_proj_p), lambda i: (i, 0)),
        compiler_params=pltpu.CompilerParams(dimension_semantics=("parallel",),
                                             vmem_limit_bytes=vmem_limit),
        cost_estimate=pl.CostEstimate(flops=int(flops2), transcendentals=int(n_pad),
                                      bytes_accessed=int(bytes2)),
    )(*args)

    return out[:N, :d_proj]


# ---------------------------------- init & pure-JAX reference ------------------------------
def init_params(key, inp_dim, proj_dim):
    """Deterministic init mirroring the PyTorch module's __init__/reset_parameters."""
    ks = jax.random.split(key, 8)

    def linear_init(kw, kb, fan_in, fan_out):
        bound = 1.0 / math.sqrt(fan_in)
        w = jax.random.uniform(kw, (fan_out, fan_in), jnp.float32, -bound, bound)
        b = jax.random.uniform(kb, (fan_out,), jnp.float32, -bound, bound)
        return w, b

    w1, b1 = linear_init(ks[0], ks[1], inp_dim, proj_dim)      # Linear(inp -> proj)
    w2, b2 = linear_init(ks[2], ks[3], proj_dim, proj_dim)     # Linear(proj -> proj)
    _, bs = linear_init(ks[4], ks[5], inp_dim, proj_dim)       # shortcut bias (default init)

    # Shortcut weight: uniform(-0.01, 0.01), then identity positions forced to 1.0.
    ws = jax.random.uniform(ks[6], (proj_dim, inp_dim), jnp.float32, -0.01, 0.01)
    eye = (jnp.arange(proj_dim)[:, None] == jnp.arange(inp_dim)[None, :])
    ws = jnp.where(eye, 1.0, ws)

    return {
        "w1_t": w1.T, "b1": b1.reshape(1, -1),
        "bn_gamma": jnp.ones((1, proj_dim), jnp.float32),
        "bn_beta": jnp.zeros((1, proj_dim), jnp.float32),
        "w2_t": w2.T, "b2": b2.reshape(1, -1),
        "ws_t": ws.T, "bs": bs.reshape(1, -1),
        "ln_gamma": jnp.ones((1, proj_dim), jnp.float32),
        "ln_beta": jnp.zeros((1, proj_dim), jnp.float32),
    }


def reference(x, p):
    """Pure-JAX f32 reference with the original (unfused, b1-included) structure."""
    hi = jax.lax.Precision.HIGHEST
    h = jnp.dot(x, p["w1_t"], precision=hi) + p["b1"]
    mean = h.mean(0, keepdims=True)
    var = ((h - mean) ** 2).mean(0, keepdims=True)
    h = (h - mean) / jnp.sqrt(var + _EPS) * p["bn_gamma"] + p["bn_beta"]
    h = jnp.maximum(h, 0.0)
    h = jnp.dot(h, p["w2_t"], precision=hi) + p["b2"]
    h = h + jnp.dot(x, p["ws_t"], precision=hi) + p["bs"]
    mu = h.mean(-1, keepdims=True)
    v = ((h - mu) ** 2).mean(-1, keepdims=True)
    return (h - mu) / jnp.sqrt(v + _EPS) * p["ln_gamma"] + p["ln_beta"]


if __name__ == "__main__":
    key = jax.random.PRNGKey(0)
    k_x, k_p = jax.random.split(key)

    N, inp_dim, proj_dim = 40, 16, 32
    x = jax.random.normal(k_x, (N, inp_dim), jnp.float32)
    params = init_params(k_p, inp_dim, proj_dim)

    ref = reference(x, params)

    # One-time weight prep (hoisted off the per-call critical path).
    prep_f32 = prepare_params(params, compute_dtype=jnp.float32)
    prep_bf16 = prepare_params(params, compute_dtype=jnp.bfloat16)

    # Small batch tile (16) so the 2-core-split pass-1 grid, pipelining, resident
    # accumulators and N-padding paths all run.  Default path here = recompute (d_in small).
    out_f32 = jax.block_until_ready(mi_projection(x, prep_f32, n_tile=16))
    out_bf16 = jax.block_until_ready(mi_projection(x, prep_bf16, n_tile=16))
    # Force the materialized-y path (compute-dtype y round trip) to exercise it too.
    out_mat = jax.block_until_ready(
        mi_projection(x, prep_bf16, n_tile=16, materialize_y=True))

    assert out_f32.shape == (N, proj_dim) and out_f32.dtype == jnp.float32
    assert out_bf16.shape == (N, proj_dim)
    assert out_mat.shape == (N, proj_dim)
    assert jnp.allclose(out_f32, ref, atol=1e-2, rtol=1e-2)
    assert jnp.allclose(out_bf16, ref, atol=5e-2, rtol=5e-2)
    assert jnp.allclose(out_mat, ref, atol=5e-2, rtol=5e-2)

    print("KERNEL_OK")
</pallas_src>

<mosaic_0001>
module attributes {stable_mosaic.version = 11 : i64} {
  func.func @_stats_kernel(%arg0: i32, %arg1: i32, %arg2: memref<16x128xf32, #tpu.memory_space<vmem>>, %arg3: memref<128x128xf32, #tpu.memory_space<vmem>>, %arg4: memref<8x128xf32, #tpu.memory_space<vmem>>, %arg5: memref<8x128xf32, #tpu.memory_space<vmem>>) attributes {dimension_semantics = [#tpu.dimension_semantics<parallel>, #tpu.dimension_semantics<arbitrary>], iteration_bounds = array<i64: 2, 2>, scalar_prefetch = 0 : i64, scratch_operands = 0 : i64, tpu.core_type = #tpu.core_type<tc>, window_params = [{transform_indices = @transform_0, window_bounds = array<i64: 16, 128>}, {pipeline_mode = #tpu.pipeline_mode<synchronous>, transform_indices = @transform_1, window_bounds = array<i64: 128, 128>}, {transform_indices = @transform_2, window_bounds = array<i64: 8, 128>}, {transform_indices = @transform_3, window_bounds = array<i64: 8, 128>}]} {
    %c0_i32 = arith.constant 0 : i32
    %0 = arith.cmpi eq, %arg1, %c0_i32 : i32
    %1 = arith.extui %0 : i1 to i32
    %c0_i32_0 = arith.constant 0 : i32
    %2 = arith.cmpi ne, %1, %c0_i32_0 : i32
    scf.if %2 {
      %cst_14 = arith.constant 0.000000e+00 : f32
      %19 = vector.broadcast %cst_14 : f32 to vector<8x128xf32>
      %c0_15 = arith.constant 0 : index
      %c0_16 = arith.constant 0 : index
      %20 = vector.load %arg4[%c0_15, %c0_16] : memref<8x128xf32, #tpu.memory_space<vmem>>, vector<8x128xf32>
      tpu.vector_store %arg4[%c0_15, %c0_16], %19 {strides = array<i32>} : memref<8x128xf32, #tpu.memory_space<vmem>>, vector<8x128xf32>,
      %cst_17 = arith.constant 0.000000e+00 : f32
      %21 = vector.broadcast %cst_17 : f32 to vector<8x128xf32>
      %c0_18 = arith.constant 0 : index
      %c0_19 = arith.constant 0 : index
      %22 = vector.load %arg5[%c0_18, %c0_19] : memref<8x128xf32, #tpu.memory_space<vmem>>, vector<8x128xf32>
      tpu.vector_store %arg5[%c0_18, %c0_19], %21 {strides = array<i32>} : memref<8x128xf32, #tpu.memory_space<vmem>>, vector<8x128xf32>,
    } else {
    }
    %c0 = arith.constant 0 : index
    %c0_1 = arith.constant 0 : index
    %3 = vector.load %arg2[%c0, %c0_1] : memref<16x128xf32, #tpu.memory_space<vmem>>, vector<16x128xf32>
    %c0_2 = arith.constant 0 : index
    %c0_3 = arith.constant 0 : index
    %4 = vector.load %arg3[%c0_2, %c0_3] : memref<128x128xf32, #tpu.memory_space<vmem>>, vector<128x128xf32>
    %cst = arith.constant dense<0.000000e+00> : vector<16x128xf32>
    %5 = tpu.matmul %3, %4, %cst {dimension_numbers = #tpu.dot_dimension_numbers<[1], [0], [0], [1], [0, 0, 1, 1], [], []>} : vector<16x128xf32>, vector<128x128xf32>, vector<16x128xf32> -> vector<16x128xf32>
    %c0_4 = arith.constant 0 : index
    %c0_5 = arith.constant 0 : index
    %6 = vector.load %arg4[%c0_4, %c0_5] : memref<8x128xf32, #tpu.memory_space<vmem>>, vector<8x128xf32>
    %cst_6 = arith.constant dense<0.000000e+00> : vector<128xf32>
    %7 = vector.multi_reduction <add>, %5, %cst_6 [0] : vector<16x128xf32> to vector<128xf32>
    %8 = vector.shape_cast %7 : vector<128xf32> to vector<1x128xf32>
    %9 = vector.broadcast %8 : vector<1x128xf32> to vector<8x128xf32>
    %10 = arith.addf %6, %9 : vector<8x128xf32>
    %c0_7 = arith.constant 0 : index
    %c0_8 = arith.constant 0 : index
    %11 = vector.load %arg4[%c0_7, %c0_8] : memref<8x128xf32, #tpu.memory_space<vmem>>, vector<8x128xf32>
    tpu.vector_store %arg4[%c0_7, %c0_8], %10 {strides = array<i32>} : memref<8x128xf32, #tpu.memory_space<vmem>>, vector<8x128xf32>,
    %c0_9 = arith.constant 0 : index
    %c0_10 = arith.constant 0 : index
    %12 = vector.load %arg5[%c0_9, %c0_10] : memref<8x128xf32, #tpu.memory_space<vmem>>, vector<8x128xf32>
    %13 = arith.mulf %5, %5 : vector<16x128xf32>
    %cst_11 = arith.constant dense<0.000000e+00> : vector<128xf32>
    %14 = vector.multi_reduction <add>, %13, %cst_11 [0] : vector<16x128xf32> to vector<128xf32>
    %15 = vector.shape_cast %14 : vector<128xf32> to vector<1x128xf32>
    %16 = vector.broadcast %15 : vector<1x128xf32> to vector<8x128xf32>
    %17 = arith.addf %12, %16 : vector<8x128xf32>
    %c0_12 = arith.constant 0 : index
    %c0_13 = arith.constant 0 : index
    %18 = vector.load %arg5[%c0_12, %c0_13] : memref<8x128xf32, #tpu.memory_space<vmem>>, vector<8x128xf32>
    tpu.vector_store %arg5[%c0_12, %c0_13], %17 {strides = array<i32>} : memref<8x128xf32, #tpu.memory_space<vmem>>, vector<8x128xf32>,
    return
  }
  func.func @transform_0(%arg0: i32, %arg1: i32) -> (i32, i32) {
    %c2_i32 = arith.constant 2 : i32
    %0 = arith.muli %arg0, %c2_i32 : i32
    %1 = arith.addi %0, %arg1 : i32
    %c0_i32 = arith.constant 0 : i32
    %c0_i32_0 = arith.constant 0 : i32
    return %1, %c0_i32 : i32, i32
  }
  func.func @transform_1(%arg0: i32, %arg1: i32) -> (i32, i32) {
    %c0_i32 = arith.constant 0 : i32
    %c0_i32_0 = arith.constant 0 : i32
    %c0_i32_1 = arith.constant 0 : i32
    return %c0_i32, %c0_i32_0 : i32, i32
  }
  func.func @transform_2(%arg0: i32, %arg1: i32) -> (i32, i32) {
    %c0_i32 = arith.constant 0 : i32
    %c0_i32_0 = arith.constant 0 : i32
    return %arg0, %c0_i32 : i32, i32
  }
  func.func @transform_3(%arg0: i32, %arg1: i32) -> (i32, i32) {
    %c0_i32 = arith.constant 0 : i32
    %c0_i32_0 = arith.constant 0 : i32
    return %arg0, %c0_i32 : i32, i32
  }
}

</mosaic_0001>

<llo_original>
// kernel: tpu_custom_call.1
$region0: #{tpu_custom_call.1}
  #allocation0 [shape = 'u32[]', space=smem, size = 0x4, offset = 0x4, fixed_abs, tag = 'smem constant byte address 0x4 - core index']
  #allocation1 [shape = 'u32[144,128]{1,0:T(1,128)}', space=vmem, size = 0x12000, scoped, tag = 'internal scratch']
  %s0 = inlined_call_operand.hbm [shape: f32[64,128], index: 0, kind: input, shape index: {}]
  %s1 = inlined_call_operand.hbm [shape: f32[128,128], index: 1, kind: input, shape index: {}]
  %s2 = inlined_call_operand.hbm [shape: f32[16,128], index: 2, kind: output, shape index: {0}]
  %s3 = inlined_call_operand.hbm [shape: f32[16,128], index: 3, kind: output, shape index: {1}]
  %4 = xla_tuple %s2, %s3
  %s5 = sld [smem:[#allocation0]]
  $region61: #{tpu_custom_call.1} parent=0
    _
  %s7 = ssub.s32 1, %s5
  %s8 = scalar_select 0, %s7, %s5
  $region1: #{tpu_custom_call.1} parent=0
    #allocation2 [shape = 'u8[16384]{0}', space=vmem, size = 0x4000, scoped, tag = 'input window, operand 0']
    #allocation3 [shape = 's32[2]{0}', space=sflag, size = 0x8, scoped, tag = 'scoped memory for tpu_custom_call.1']
    #allocation4 [shape = 's32[2]{0}', space=sflag, size = 0x8, scoped, tag = 'scoped memory for tpu_custom_call.1']
    #allocation5 [shape = 'u8[65536]{0}', space=vmem, size = 0x10000, scoped, tag = 'input window, operand 1, single buffered']
    #allocation6 [shape = 's32[1]{0}', space=sflag, size = 0x4, scoped, tag = 'scoped memory for tpu_custom_call.1']
    #allocation7 [shape = 'u8[8192]{0}', space=vmem, size = 0x2000, scoped, tag = 'output window, operand 0']
    #allocation8 [shape = 'u8[8192]{0}', space=vmem, size = 0x2000, scoped, tag = 'output window, operand 1']
    #allocation9 [shape = 's32[2]{0}', space=sflag, size = 0x8, scoped, tag = 'scoped memory for tpu_custom_call.1']
    %9 = vsyncpa [#allocation3], 0
    %s10 = scalar_lea.sflag [#allocation3], 1
    %11 = vsyncpa %s10, 0
    %12 = vsyncpa [#allocation6], 0
    %13 = vsyncpa [#allocation4], 0
    %s14 = scalar_lea.sflag [#allocation4], 1
    %15 = vsyncpa %s14, 0
    %16 = vsyncpa [#allocation9], 0
    %s17 = scalar_lea.sflag [#allocation9], 1
    %18 = vsyncpa %s17, 0
    loop: start=0, step=1, limit=6
    $region2: #{tpu_custom_call.1} parent=1 // loop_pre_header
      _
    $region3: #{tpu_custom_call.1} parent=1 // loop_header
      %s20 = sphi 0, %s24
      %p21 = scmp.ge.s32.totalorder %s20, 6
      %s27 = sphi 0, %s39
      %s28 = sphi 0, %s35
      %s29 = sphi 0, %s27
      %s30 = sphi 0, %s28
      %s31 = sphi 0, %s29
      %s32 = sphi 0, %s30
      %s46 = sphi 0, %s48
      %s49 = sphi 0, %s46
      %s50 = sphi 0, %s49
      %s66 = sphi 0, %s50
      %s70 = sphi 0, %s70
      %s72 = sphi 0, %s70
      %s73 = sphi 0, %s72
      %s87 = sphi 0, %s73
      %s93 = sphi 0, %s95
      %s96 = sphi 0, %s93
      %s97 = sphi 0, %s96
      %s113 = sphi 0, %s97
      %s119 = sphi 0, %s121
      %s122 = sphi 0, %s119
      %s123 = sphi 0, %s122
      %s139 = sphi 0, %s123
    $region4: #{tpu_custom_call.1} parent=1 // loop_header_branch
      %23 = sbr.rel (%p21) target = $region8
    $region5: #{tpu_custom_call.1} parent=1 // loop_body
      %s25 = ssub.s32 %s20, 1
      %s26 = ssub.s32 %s20, 2
      %s33 = sadd.s32 1, %s28
      %p34 = scmp.ge.s32.totalorder %s33, 2
      %s35 = scalar_select %p34, 0, %s33
      %s36 = sadd.s32 1, %s27
      %s37 = scalar_select %p34, %s36, %s27
      %p38 = scmp.ge.s32.totalorder %s37, 2
      %s39 = scalar_select %p38, 0, %s37
      %s40 = smul.u32 %s27, 2
      %s41 = sadd.s32 %s40, %s28
      %s42 = smul.u32 %s39, 2
      %s43 = sadd.s32 %s42, %s35
      %s44 = ssub.s32 %s41, %s43
      %p45 = scmp.eq.s32.totalorder %s44, 0
      %s47 = sadd.s32 %s46, 1
      %s48 = scalar_select %p45, %s46, %s47
      %p51 = pneg %p45
      %p52 = scmp.eq.s32.totalorder %s20, 3
      %p53 = por %p51, %p52
      %p54 = scmp.ne.s32.totalorder %s46, %s49
      %p55 = scmp.eq.s32.totalorder %s20, 0
      %p56 = por %p54, %p55
      %p57 = scmp.ne.s32.totalorder %s46, %s49
      %p58 = scmp.eq.s32.totalorder %s25, 3
      %p59 = por %p57, %p58
      %p60 = scmp.ne.s32.totalorder %s49, %s50
      %p61 = scmp.eq.s32.totalorder %s25, 0
      %p62 = por %p60, %p61
      %p63 = scmp.ne.s32.totalorder %s49, %s50
      %p64 = scmp.eq.s32.totalorder %s26, 3
      %p65 = por %p63, %p64
      %p67 = scmp.ne.s32.totalorder %s50, %s66
      %p68 = scmp.eq.s32.totalorder %s26, 0
      %p69 = por %p67, %p68
      %s71 = sadd.s32 %s70, 1
      %p74 = scmp.eq.s32.totalorder %s20, 3
      %p75 = scmp.ne.s32.totalorder %s70, %s72
      %p76 = scmp.eq.s32.totalorder %s20, 0
      %p77 = por %p75, %p76
      %p78 = scmp.ne.s32.totalorder %s70, %s72
      %p79 = scmp.eq.s32.totalorder %s25, 3
      %p80 = por %p78, %p79
      %p81 = scmp.ne.s32.totalorder %s72, %s73
      %p82 = scmp.eq.s32.totalorder %s25, 0
      %p83 = por %p81, %p82
      %p84 = scmp.ne.s32.totalorder %s72, %s73
      %p85 = scmp.eq.s32.totalorder %s26, 3
      %p86 = por %p84, %p85
      %p88 = scmp.ne.s32.totalorder %s73, %s87
      %p89 = scmp.eq.s32.totalorder %s26, 0
      %p90 = por %p88, %p89
      %s91 = ssub.s32 %s27, %s39
      %p92 = scmp.eq.s32.totalorder %s91, 0
      %s94 = sadd.s32 %s93, 1
      %s95 = scalar_select %p92, %s93, %s94
      %p98 = pneg %p92
      %p99 = scmp.eq.s32.totalorder %s20, 3
      %p100 = por %p98, %p99
      %p101 = scmp.ne.s32.totalorder %s93, %s96
      %p102 = scmp.eq.s32.totalorder %s20, 0
      %p103 = por %p101, %p102
      %p104 = scmp.ne.s32.totalorder %s93, %s96
      %p105 = scmp.eq.s32.totalorder %s25, 3
      %p106 = por %p104, %p105
      %p107 = scmp.ne.s32.totalorder %s96, %s97
      %p108 = scmp.eq.s32.totalorder %s25, 0
      %p109 = por %p107, %p108
      %p110 = scmp.ne.s32.totalorder %s96, %s97
      %p111 = scmp.eq.s32.totalorder %s26, 3
      %p112 = por %p110, %p111
      %p114 = scmp.ne.s32.totalorder %s97, %s113
      %p115 = scmp.eq.s32.totalorder %s26, 0
      %p116 = por %p114, %p115
      %s117 = ssub.s32 %s27, %s39
      %p118 = scmp.eq.s32.totalorder %s117, 0
      %s120 = sadd.s32 %s119, 1
      %s121 = scalar_select %p118, %s119, %s120
      %p124 = pneg %p118
      %p125 = scmp.eq.s32.totalorder %s20, 3
      %p126 = por %p124, %p125
      %p127 = scmp.ne.s32.totalorder %s119, %s122
      %p128 = scmp.eq.s32.totalorder %s20, 0
      %p129 = por %p127, %p128
      %p130 = scmp.ne.s32.totalorder %s119, %s122
      %p131 = scmp.eq.s32.totalorder %s25, 3
      %p132 = por %p130, %p131
      %p133 = scmp.ne.s32.totalorder %s122, %s123
      %p134 = scmp.eq.s32.totalorder %s25, 0
      %p135 = por %p133, %p134
      %p136 = scmp.ne.s32.totalorder %s122, %s123
      %p137 = scmp.eq.s32.totalorder %s26, 3
      %p138 = por %p136, %p137
      %p140 = scmp.ne.s32.totalorder %s123, %s139
      %p141 = scmp.eq.s32.totalorder %s26, 0
      %p142 = por %p140, %p141
      %p143 = scmp.le.s32.totalorder 1, %s20
      %p144 = scmp.lt.s32.totalorder %s20, 5
      %p145 = pnand %p143, %p144
      %p146 = pneg %p145
      // Predicated region
      $region9: #{tpu_custom_call.1} parent=5 // pred_check
        _
      $region10: #{tpu_custom_call.1} parent=5 // pred_check_branch
        %148 = sbr.rel (%p145) target = $region12
      $region11: #{tpu_custom_call.1} parent=5 // pred_region
        %s149 = ssub.s32 %s20, 1
        // Predicated region
        $region13: #{tpu_custom_call.1} parent=11 // pred_check
          %p150 = pneg %p83
        $region14: #{tpu_custom_call.1} parent=11 // pred_check_branch
          %152 = sbr.rel (%p150) target = $region16
        $region15: #{tpu_custom_call.1} parent=11 // pred_region
          %s154 = ssub.s32 2048, 2048
          %155 = vsyncadd [#allocation6], %s154
          %s156 = sshll.u32 [#allocation5], 4
          %s157 = int_to_ptr.vmem [resolvable:$true] %s156
          %162 = dma.hbm_to_vmem [thread:$0]  %s1, 2048, %s157, [#allocation6], 128, 128, 8
        $region16: #{tpu_custom_call.1} parent=11 // pred_fallthru
          _
      $region12: #{tpu_custom_call.1} parent=5 // pred_fallthru
        _
      %p163 = scmp.lt.s32.totalorder %s20, 4
      // Predicated region
      $region17: #{tpu_custom_call.1} parent=5 // pred_check
        %p164 = pneg %p163
      $region18: #{tpu_custom_call.1} parent=5 // pred_check_branch
        %166 = sbr.rel (%p164) target = $region20
      $region19: #{tpu_custom_call.1} parent=5 // pred_region
        // Predicated region
        $region21: #{tpu_custom_call.1} parent=19 // pred_check
          %p167 = pneg %p56
        $region22: #{tpu_custom_call.1} parent=19 // pred_check_branch
          %169 = sbr.rel (%p167) target = $region24
        $region23: #{tpu_custom_call.1} parent=19 // pred_region
          %s170 = sand.u32 %s46, 1
          %s171 = scalar_lea.sflag [#allocation3], %s170
          %s172 = sand.u32 %s46, 1
          %s173 = smul.addr %s172, 16
          %s174 = scalar_lea.vmem [#allocation2], %s173
          %s175 = smul.u32 %s27, 2
          %s176 = sadd.s32 %s175, %s28
          %s177 = smul.u32 2, %s176
          %s179 = ssub.s32 256, 256
          %180 = vsyncadd %s171, %s179
          %s181 = smul.addr %s177, 128
          %s182 = scalar_lea.hbm %s0, %s181
          %s183 = sshll.u32 %s174, 4
          %s184 = int_to_ptr.vmem [resolvable:$true] %s183
          %189 = dma.hbm_to_vmem [thread:$0]  %s182, 256, %s184, %s171, 128, 128, 8
        $region24: #{tpu_custom_call.1} parent=19 // pred_fallthru
          _
      $region20: #{tpu_custom_call.1} parent=5 // pred_fallthru
        _
      %p190 = scmp.le.s32.totalorder 1, %s20
      %p191 = scmp.lt.s32.totalorder %s20, 5
      %p192 = pnand %p190, %p191
      %p193 = pneg %p192
      // Predicated region
      $region25: #{tpu_custom_call.1} parent=5 // pred_check
        _
      $region26: #{tpu_custom_call.1} parent=5 // pred_check_branch
        %195 = sbr.rel (%p192) target = $region28
      $region27: #{tpu_custom_call.1} parent=5 // pred_region
        %s196 = ssub.s32 %s20, 1
        %s197 = sand.u32 %s49, 1
        %s198 = scalar_lea.sflag [#allocation3], %s197
        %s199 = sand.u32 %s49, 1
        %s200 = smul.addr %s199, 16
        %s201 = scalar_lea.vmem [#allocation2], %s200
        // Predicated region
        $region29: #{tpu_custom_call.1} parent=27 // pred_check
          %p202 = pneg %p62
        $region30: #{tpu_custom_call.1} parent=27 // pred_check_branch
          %204 = sbr.rel (%p202) target = $region32
        $region31: #{tpu_custom_call.1} parent=27 // pred_region
          %205 = dma.done %s198, 256
        $region32: #{tpu_custom_call.1} parent=27 // pred_fallthru
          _
        // Predicated region
        $region33: #{tpu_custom_call.1} parent=27 // pred_check
          %p206 = pneg %p83
        $region34: #{tpu_custom_call.1} parent=27 // pred_check_branch
          %208 = sbr.rel (%p206) target = $region36
        $region35: #{tpu_custom_call.1} parent=27 // pred_region
          %209 = dma.done [#allocation6], 2048
        $region36: #{tpu_custom_call.1} parent=27 // pred_fallthru
          _
        %s210 = sand.u32 %s49, 1
        %s211 = scalar_lea.sflag [#allocation3], %s210
        %s212 = sand.u32 %s49, 1
        %s213 = smul.addr %s212, 16
        %s214 = scalar_lea.vmem [#allocation2], %s213
        %p215 = pneg %p62
        %p216 = pneg %p59
        %p217 = pneg %p83
        %p218 = pneg %p80
        %p219 = pneg %p109
        %p220 = pneg %p106
        %s221 = sand.u32 %s96, 1
        %s222 = scalar_lea.sflag [#allocation4], %s221
        %s223 = sand.u32 %s96, 1
        %s224 = smul.addr %s223, 8
        %s225 = scalar_lea.vmem [#allocation7], %s224
        %p226 = pneg %p135
        %p227 = pneg %p132
        %s228 = sand.u32 %s122, 1
        %s229 = scalar_lea.sflag [#allocation9], %s228
        %s230 = sand.u32 %s122, 1
        %s231 = smul.addr %s230, 8
        %s232 = scalar_lea.vmem [#allocation8], %s231
        %s233 = smul.u32 %s29, 2
        %s234 = sadd.s32 %s233, %s30
        %s235 = smul.u32 2, %s234
        %p236 = scmp.eq.s32.totalorder %s30, 0
        // Predicated region
        $region37: #{tpu_custom_call.1} parent=27 // pred_check
          %p237 = pneg %p236
        $region38: #{tpu_custom_call.1} parent=27 // pred_check_branch
          %239 = sbr.rel (%p237) target = $region40
        $region39: #{tpu_custom_call.1} parent=27 // pred_region
          %240 = vst [vmem:[%s225] sm:$0xff] 0.0
          %241 = vst [vmem:[%s232] sm:$0xff] 0.0
        $region40: #{tpu_custom_call.1} parent=27 // pred_fallthru
          _
        %v242 = vld [vmem:[%s201] sm:$0xff]
        %v243 = vld [vmem:[%s201 + $0x8] sm:$0xff]
        %v244 = vld [vmem:[#allocation5] sm:$0xff]
        %v245 = vld [vmem:[#allocation5 + $0x8] sm:$0xff]
        %v246 = vld [vmem:[#allocation5 + $0x10] sm:$0xff]
        %v247 = vld [vmem:[#allocation5 + $0x18] sm:$0xff]
        %v248 = vld [vmem:[#allocation5 + $0x20] sm:$0xff]
        %v249 = vld [vmem:[#allocation5 + $0x28] sm:$0xff]
        %v250 = vld [vmem:[#allocation5 + $0x30] sm:$0xff]
        %v251 = vld [vmem:[#allocation5 + $0x38] sm:$0xff]
        %v252 = vld [vmem:[#allocation5 + $0x40] sm:$0xff]
        %v253 = vld [vmem:[#allocation5 + $0x48] sm:$0xff]
        %v254 = vld [vmem:[#allocation5 + $0x50] sm:$0xff]
        %v255 = vld [vmem:[#allocation5 + $0x58] sm:$0xff]
        %v256 = vld [vmem:[#allocation5 + $0x60] sm:$0xff]
        %v257 = vld [vmem:[#allocation5 + $0x68] sm:$0xff]
        %v258 = vld [vmem:[#allocation5 + $0x70] sm:$0xff]
        %v259 = vld [vmem:[#allocation5 + $0x78] sm:$0xff]
        %260 = vmatprep.subr.mxu0 0.0
        %261 = vmatpush1.msra.mxu0 %v244
        %262 = vmatprep.subr.mxu0 0.0
        %263 = vmatpush1.msra.mxu0 %v245
        %264 = vmatprep.subr.mxu0 0.0
        %265 = vmatpush1.msra.mxu0 %v246
        %266 = vmatprep.subr.mxu0 0.0
        %267 = vmatpush1.msra.mxu0 %v247
        %268 = vmatprep.subr.mxu0 0.0
        %269 = vmatpush1.msra.mxu0 %v248
        %270 = vmatprep.subr.mxu0 0.0
        %271 = vmatpush1.msra.mxu0 %v249
        %272 = vmatprep.subr.mxu0 0.0
        %273 = vmatpush1.msra.mxu0 %v250
        %274 = vmatprep.subr.mxu0 0.0
        %275 = vmatpush1.msra.mxu0 %v251
        %276 = vmatprep.subr.mxu0 0.0
        %277 = vmatpush1.msra.mxu0 %v252
        %278 = vmatprep.subr.mxu0 0.0
        %279 = vmatpush1.msra.mxu0 %v253
        %280 = vmatprep.subr.mxu0 0.0
        %281 = vmatpush1.msra.mxu0 %v254
        %282 = vmatprep.subr.mxu0 0.0
        %283 = vmatpush1.msra.mxu0 %v255
        %284 = vmatprep.subr.mxu0 0.0
        %285 = vmatpush1.msra.mxu0 %v256
        %286 = vmatprep.subr.mxu0 0.0
        %287 = vmatpush1.msra.mxu0 %v257
        %288 = vmatprep.subr.mxu0 0.0
        %289 = vmatpush1.msra.mxu0 %v258
        %290 = vmatprep.subr.mxu0 0.0
        %291 = vmatpush1.msra.mxu0 %v259
        %292 = vmatprep.subr.mxu0 0.0
        %293 = vmatpush1.msra.mxu0 0.0
        %294 = vmatprep.subr.mxu0 0.0
        %295 = vmatpush1.msra.mxu0 0.0
        %296 = vmatprep.subr.mxu0 0.0
        %297 = vmatpush1.msra.mxu0 0.0
        %298 = vmatprep.subr.mxu0 0.0
        %299 = vmatpush1.msra.mxu0 0.0
        %300 = vmatprep.subr.mxu0 0.0
        %301 = vmatpush1.msra.mxu0 0.0
        %302 = vmatprep.subr.mxu0 0.0
        %303 = vmatpush1.msra.mxu0 0.0
        %304 = vmatprep.subr.mxu0 0.0
        %305 = vmatpush1.msra.mxu0 0.0
        %306 = vmatprep.subr.mxu0 0.0
        %307 = vmatpush1.msra.mxu0 0.0
        %308 = vmatprep.subr.mxu0 0.0
        %309 = vmatpush1.msra.mxu0 0.0
        %310 = vmatprep.subr.mxu0 0.0
        %311 = vmatpush1.msra.mxu0 0.0
        %312 = vmatprep.subr.mxu0 0.0
        %313 = vmatpush1.msra.mxu0 0.0
        %314 = vmatprep.subr.mxu0 0.0
        %315 = vmatpush1.msra.mxu0 0.0
        %316 = vmatprep.subr.mxu0 0.0
        %317 = vmatpush1.msra.mxu0 0.0
        %318 = vmatprep.subr.mxu0 0.0
        %319 = vmatpush1.msra.mxu0 0.0
        %320 = vmatprep.subr.mxu0 0.0
        %321 = vmatpush1.msra.mxu0 0.0
        %322 = vmatprep.subr.mxu0 0.0
        %323 = vmatpush1.msra.mxu0 0.0
        %324 = vmatprep.mubr.f32.mxu0 0.0
        %325 = vmatmul.mubr.f32.gmra.mrb[0].mxu0 %v242
        %v326 = vpop.f32.mrb[0].mxu0
        %v327 = vadd.f32 0.0, %v326
        %v328 = vpop.f32.mrb[0].mxu0
        %329 = vmatprep.mubr.f32.mxu0 0.0
        %330 = vmatmul.mubr.f32.gmra.mrb[0].mxu0 %v243
        %v331 = vpop.f32.mrb[0].mxu0
        %v332 = vadd.f32 0.0, %v331
        %v333 = vpop.f32.mrb[0].mxu0
        %334 = vdwg.mxu0
        %v335 = vld [vmem:[%s225] sm:$0xff]
        %v336 = vadd.f32 %v327, %v332
        %v337 = vrot.slane %v336, 4
        %v338 = vadd.f32 %v336, %v337
        %v339 = vrot.slane %v338, 2
        %v340 = vadd.f32 %v338, %v339
        %v341 = vrot.slane %v340, 1
        %v342 = vadd.f32 %v340, %v341
        %v343 = vadd.f32 %v335, %v342
        %344 = vst [vmem:[%s225] sm:$0xff] %v343
        %v345 = vld [vmem:[%s232] sm:$0xff]
        %v346 = vmul.f32 %v327, %v327
        %v347 = vmul.f32 %v332, %v332
        %v348 = vadd.f32 %v346, %v347
        %v349 = vrot.slane %v348, 4
        %v350 = vadd.f32 %v348, %v349
        %v351 = vrot.slane %v350, 2
        %v352 = vadd.f32 %v350, %v351
        %v353 = vrot.slane %v352, 1
        %v354 = vadd.f32 %v352, %v353
        %v355 = vadd.f32 %v345, %v354
        %356 = vst [vmem:[%s232] sm:$0xff] %v355
        %s357 = sand.u32 %s96, 1
        %s358 = scalar_lea.sflag [#allocation4], %s357
        %s359 = sand.u32 %s96, 1
        %s360 = smul.addr %s359, 8
        %s361 = scalar_lea.vmem [#allocation7], %s360
        %s362 = sand.u32 %s122, 1
        %s363 = scalar_lea.sflag [#allocation9], %s362
        %s364 = sand.u32 %s122, 1
        %s365 = smul.addr %s364, 8
        %s366 = scalar_lea.vmem [#allocation8], %s365
        // Predicated region
        $region41: #{tpu_custom_call.1} parent=27 // pred_check
          %p367 = pneg %p106
        $region42: #{tpu_custom_call.1} parent=27 // pred_check_branch
          %369 = sbr.rel (%p367) target = $region44
        $region43: #{tpu_custom_call.1} parent=27 // pred_region
          %s371 = ssub.s32 128, 128
          %372 = vsyncadd %s358, %s371
          %s373 = smul.addr %s29, 128
          %s374 = scalar_lea.hbm %s2, %s373
          %s376 = sshll.u32 %s361, 4
          %s377 = int_to_ptr.vmem [resolvable:$true] %s376
          %379 = dma.vmem_to_hbm [thread:$0]  %s377, 128, %s374, %s358
        $region44: #{tpu_custom_call.1} parent=27 // pred_fallthru
          _
        // Predicated region
        $region45: #{tpu_custom_call.1} parent=27 // pred_check
          %p380 = pneg %p132
        $region46: #{tpu_custom_call.1} parent=27 // pred_check_branch
          %382 = sbr.rel (%p380) target = $region48
        $region47: #{tpu_custom_call.1} parent=27 // pred_region
          %s384 = ssub.s32 128, 128
          %385 = vsyncadd %s363, %s384
          %s386 = smul.addr %s29, 128
          %s387 = scalar_lea.hbm %s3, %s386
          %s389 = sshll.u32 %s366, 4
          %s390 = int_to_ptr.vmem [resolvable:$true] %s389
          %392 = dma.vmem_to_hbm [thread:$0]  %s390, 128, %s387, %s363
        $region48: #{tpu_custom_call.1} parent=27 // pred_fallthru
          _
      $region28: #{tpu_custom_call.1} parent=5 // pred_fallthru
        _
      %p393 = scmp.le.s32.totalorder 2, %s20
      // Predicated region
      $region49: #{tpu_custom_call.1} parent=5 // pred_check
        %p394 = pneg %p393
      $region50: #{tpu_custom_call.1} parent=5 // pred_check_branch
        %396 = sbr.rel (%p394) target = $region52
      $region51: #{tpu_custom_call.1} parent=5 // pred_region
        %s397 = ssub.s32 %s20, 2
        // Predicated region
        $region53: #{tpu_custom_call.1} parent=51 // pred_check
          %p398 = pneg %p112
        $region54: #{tpu_custom_call.1} parent=51 // pred_check_branch
          %400 = sbr.rel (%p398) target = $region56
        $region55: #{tpu_custom_call.1} parent=51 // pred_region
          %s401 = sand.u32 %s97, 1
          %s402 = scalar_lea.sflag [#allocation4], %s401
          %s403 = sand.u32 %s97, 1
          %s404 = smul.addr %s403, 8
          %s405 = scalar_lea.vmem [#allocation7], %s404
          %406 = dma.done %s402, 128
        $region56: #{tpu_custom_call.1} parent=51 // pred_fallthru
          _
        // Predicated region
        $region57: #{tpu_custom_call.1} parent=51 // pred_check
          %p407 = pneg %p138
        $region58: #{tpu_custom_call.1} parent=51 // pred_check_branch
          %409 = sbr.rel (%p407) target = $region60
        $region59: #{tpu_custom_call.1} parent=51 // pred_region
          %s410 = sand.u32 %s123, 1
          %s411 = scalar_lea.sflag [#allocation9], %s410
          %s412 = sand.u32 %s123, 1
          %s413 = smul.addr %s412, 8
          %s414 = scalar_lea.vmem [#allocation8], %s413
          %415 = dma.done %s411, 128
        $region60: #{tpu_custom_call.1} parent=51 // pred_fallthru
          _
      $region52: #{tpu_custom_call.1} parent=5 // pred_fallthru
        _
    $region6: #{tpu_custom_call.1} parent=1 // loop_footer
      %s24 = sadd.s32 1, %s20
    $region7: #{tpu_custom_call.1} parent=1 // loop_footer_branch
      %19 = sbr.rel target = $region3
    $region8: #{tpu_custom_call.1} parent=1 // loop_exit
      _
    %416 = vsyncpa [#allocation3], 1
    %s417 = scalar_lea.sflag [#allocation3], 1
    %418 = vsyncpa %s417, 1
    %419 = vsyncpa [#allocation6], 1
    %420 = vsyncpa [#allocation4], 1
    %s421 = scalar_lea.sflag [#allocation4], 1
    %422 = vsyncpa %s421, 1
    %423 = vsyncpa [#allocation9], 1
    %s424 = scalar_lea.sflag [#allocation9], 1
    %425 = vsyncpa %s424, 1

</llo_original>
